<compile_context>
chip_gen: v5e
topology: v5e:2x2
jax: 0.10.0
libtpu: 0.0.40
codegen_flags: <defaults>
</compile_context>

<pallas_src>
import functools

import jax
import jax.numpy as jnp
from jax.experimental import pallas as pl
from jax.experimental.pallas import tpu as pltpu


_SPLIT_MIN_ROWS = 256  # >= this many rows -> force >=2 grid tiles (v7x megacore)


def _sublane_pack(dtype) -> int:
    """Min sublane multiple for a packed dtype (f32:8, bf16:16, int8/fp8:32)."""
    return {1: 32, 2: 16, 4: 8}.get(jnp.dtype(dtype).itemsize, 8)


def _round_up(x: int, m: int) -> int:
    return ((x + m - 1) // m) * m


def _mse_lev_kernel(coef_ref, sim_ref, lev_ref, out_ref, *,
                    block_rows, n_cols, tail_rows):
    """One grid step: squared-error partial sums for a (block_rows, n_cols) tile.

    coef_ref : SMEM (4,) f32 scalar-prefetch -> [a, s1, s2, c2]
    sim_ref  : VMEM (block_rows, n_cols) similarities tile (native dtype)
    lev_ref  : VMEM (block_rows, n_cols) target levs tile (native dtype)
    out_ref  : VMEM (8, n_cols) f32 partial-sum tile for this grid step
    """
    a = coef_ref[0]    # tanh(alpha)
    s1 = coef_ref[1]   # b / (1 + a)        -> left  = sim*s1 + s1
    s2 = coef_ref[2]   # (b - 1) / (a - 1)  -> right = sim*s2 + c2
    c2 = coef_ref[3]   # (a - b) / (a - 1)

    sim = sim_ref[...].astype(jnp.float32)
    lev = lev_ref[...].astype(jnp.float32)

    # Piecewise-affine pseudo-Levenshtein map: two selects + one fused mul-add.
    msk = sim < a
    slope = jnp.where(msk, s1, s2)
    intercept = jnp.where(msk, s1, c2)
    diff = sim * slope + (intercept - lev)
    d2 = diff * diff

    groups = block_rows // 8

    def _fold(x):
        # Fold rows into an (8, n_cols) lane-dense partial-sum tile.
        # (layout-trivial reshape: sublane groups of 8 stay intact)
        return jnp.sum(x.reshape(groups, 8, n_cols), axis=0)

    if tail_rows == block_rows:
        # Every block is full: no masking anywhere.
        out_ref[...] = _fold(d2)
    else:
        # Only the last grid step carries a (static) partial-block row mask;
        # all other steps stay on the mask-free path.
        i = pl.program_id(0)
        last = pl.num_programs(0) - 1

        @pl.when(i != last)
        def _():
            out_ref[...] = _fold(d2)

        @pl.when(i == last)
        def _():
            rows = jax.lax.broadcasted_iota(jnp.int32, (block_rows, n_cols), 0)
            out_ref[...] = _fold(jnp.where(rows < tail_rows, d2, 0.0))


def mse_levenshtein_loss_old(similarities, levs, alpha, beta, *,
                             max_block_rows=8192):
    """Forward of MSELevenshteinLoss_old. Returns a scalar f32 loss."""
    n = int(similarities.size)
    assert int(levs.size) == n and n > 0, "inputs must be same-size and non-empty"

    C = 128
    pack = max(_sublane_pack(similarities.dtype), _sublane_pack(levs.dtype))

    # Lane-dense 2-D view [R, 128]; R a multiple of the dtype sublane pack.
    R = max(pack, _round_up(pl.cdiv(n, C), pack))
    cap = max(pack, (max_block_rows // pack) * pack)
    if R > cap:
        block_rows = cap
    elif R >= _SPLIT_MIN_ROWS:
        # Would fit in one block, but split in two so the "parallel" grid axis
        # can engage both v7x TensorCores (no effect on v5e/v6e).
        block_rows = _round_up(pl.cdiv(R, 2), pack)
    else:
        block_rows = R
    num_tiles = pl.cdiv(R, block_rows)
    tail_rows = R - (num_tiles - 1) * block_rows  # valid rows in the last block

    sims = similarities.reshape(-1)
    levs_f = levs.reshape(-1)
    pad = R * C - n
    if pad:
        # Pad with 1.0: pseudo(1.0) == 1.0 and lev == 1.0 -> zero contribution,
        # so no per-element mask is needed in the kernel.
        # TODO(synk): for very large non-lane-aligned inputs this pad is an
        # extra full read+write; feed 1024-aligned flats upstream to skip it.
        sims = jnp.pad(sims, (0, pad), constant_values=1.0)
        levs_f = jnp.pad(levs_f, (0, pad), constant_values=1.0)
    sims = sims.reshape(R, C)
    levs_f = levs_f.reshape(R, C)

    # Parameter "normalization" + affine coefficients (same math as module;
    # alpha/beta may be traced learnable parameters).
    a = jnp.tanh(jnp.asarray(alpha, jnp.float32))
    b = jax.nn.sigmoid(jnp.asarray(beta, jnp.float32))
    s1 = b / (1.0 + a)
    s2 = (b - 1.0) / (a - 1.0)
    c2 = (a - b) / (a - 1.0)
    coef = jnp.stack([a, s1, s2, c2]).astype(jnp.float32)  # (4,) scalar prefetch

    kernel = functools.partial(_mse_lev_kernel,
                               block_rows=block_rows, n_cols=C,
                               tail_rows=tail_rows)

    partials = pl.pallas_call(
        kernel,
        out_shape=jax.ShapeDtypeStruct((num_tiles * 8, C), jnp.float32),
        grid_spec=pltpu.PrefetchScalarGridSpec(
            num_scalar_prefetch=1,          # coef -> SMEM before the grid runs
            grid=(num_tiles,),
            in_specs=[
                pl.BlockSpec((block_rows, C), lambda i, coef: (i, 0)),
                pl.BlockSpec((block_rows, C), lambda i, coef: (i, 0)),
            ],
            out_specs=pl.BlockSpec((8, C), lambda i, coef: (i, 0)),
        ),
        compiler_params=pltpu.CompilerParams(
            dimension_semantics=("parallel",),
            vmem_limit_bytes=40 << 20),
    )(coef, sims, levs_f)

    # Tiny final reduction + mean normalization in plain JAX.
    return jnp.sum(partials) * jnp.float32(1.0 / n)


def _reference(similarities, levs, alpha, beta):
    a = jnp.tanh(jnp.float32(alpha))
    b = jax.nn.sigmoid(jnp.float32(beta))
    sim = similarities.reshape(-1).astype(jnp.float32)
    left = (sim + 1.0) * b / (1.0 + a)
    right = ((b - 1.0) * sim + a - b) / (a - 1.0)
    pseudo = jnp.where(sim < a, left, right)
    return jnp.mean((pseudo - levs.reshape(-1).astype(jnp.float32)) ** 2)


if __name__ == "__main__":
    key = jax.random.PRNGKey(0)
    k1, k2, k3, k4, k5, k6 = jax.random.split(key, 6)

    # Deterministic module parameters (__init__ defaults of the old loss).
    alpha = 0.6
    beta = -1.0

    # Case 1: tiny ragged size (n = 2*4*37 = 296) -> single full block,
    # exercises the 1.0-padded tail.
    sim1 = jax.random.uniform(k1, (2, 4, 37), jnp.float32, minval=-1.0, maxval=1.0)
    lev1 = jax.random.uniform(k2, (2, 4, 37), jnp.float32, minval=0.0, maxval=1.0)
    out1 = jax.block_until_ready(mse_levenshtein_loss_old(sim1, lev1, alpha, beta))
    ref1 = _reference(sim1, lev1, alpha, beta)
    assert jnp.allclose(out1, ref1, rtol=1e-5, atol=1e-6), (out1, ref1)

    # Case 2: multi-tile grid with a partial (masked) last block.
    sim2 = jax.random.uniform(k3, (8, 300), jnp.float32, minval=-1.0, maxval=1.0)
    lev2 = jax.random.uniform(k4, (8, 300), jnp.float32, minval=0.0, maxval=1.0)
    out2 = jax.block_until_ready(
        mse_levenshtein_loss_old(sim2, lev2, alpha, beta, max_block_rows=16))
    ref2 = _reference(sim2, lev2, alpha, beta)
    assert jnp.allclose(out2, ref2, rtol=1e-5, atol=1e-6), (out2, ref2)

    # Case 3: bf16 similarities (sublane pack 16) + automatic 2-way tile split.
    sim3 = jax.random.uniform(k5, (32, 1100), jnp.float32,
                              minval=-1.0, maxval=1.0).astype(jnp.bfloat16)
    lev3 = jax.random.uniform(k6, (32, 1100), jnp.float32, minval=0.0, maxval=1.0)
    out3 = jax.block_until_ready(mse_levenshtein_loss_old(sim3, lev3, alpha, beta))
    ref3 = _reference(sim3, lev3, alpha, beta)
    assert jnp.allclose(out3, ref3, rtol=1e-4, atol=1e-5), (out3, ref3)

    # TODO(synk): training-time autograd of alpha/beta (nn.Parameter) is out of
    # scope here; only the forward loss is implemented as a kernel.
    print("KERNEL_OK")
</pallas_src>

<mosaic_0001>
module attributes {stable_mosaic.version = 11 : i64} {
  func.func @_mse_lev_kernel(%arg0: i32, %arg1: memref<4xf32, #tpu.memory_space<smem>>, %arg2: memref<8x128xf32, #tpu.memory_space<vmem>>, %arg3: memref<8x128xf32, #tpu.memory_space<vmem>>, %arg4: memref<8x128xf32, #tpu.memory_space<vmem>>) attributes {dimension_semantics = [#tpu.dimension_semantics<parallel>], iteration_bounds = array<i64: 1>, scalar_prefetch = 1 : i64, scratch_operands = 0 : i64, tpu.core_type = #tpu.core_type<tc>, window_params = [{transform_indices = @transform_0, window_bounds = array<i64: 8, 128>}, {transform_indices = @transform_1, window_bounds = array<i64: 8, 128>}, {transform_indices = @transform_2, window_bounds = array<i64: 8, 128>}]} {
    %c0 = arith.constant 0 : index
    %0 = memref.load %arg1[%c0] : memref<4xf32, #tpu.memory_space<smem>>
    %c1 = arith.constant 1 : index
    %1 = memref.load %arg1[%c1] : memref<4xf32, #tpu.memory_space<smem>>
    %c2 = arith.constant 2 : index
    %2 = memref.load %arg1[%c2] : memref<4xf32, #tpu.memory_space<smem>>
    %c3 = arith.constant 3 : index
    %3 = memref.load %arg1[%c3] : memref<4xf32, #tpu.memory_space<smem>>
    %c0_0 = arith.constant 0 : index
    %c0_1 = arith.constant 0 : index
    %4 = vector.load %arg2[%c0_0, %c0_1] : memref<8x128xf32, #tpu.memory_space<vmem>>, vector<8x128xf32>
    %c0_2 = arith.constant 0 : index
    %c0_3 = arith.constant 0 : index
    %5 = vector.load %arg3[%c0_2, %c0_3] : memref<8x128xf32, #tpu.memory_space<vmem>>, vector<8x128xf32>
    %6 = vector.broadcast %0 : f32 to vector<8x128xf32>
    %7 = arith.cmpf olt, %4, %6 : vector<8x128xf32>
    %8 = vector.broadcast %1 : f32 to vector<8x128xf32>
    %9 = vector.broadcast %2 : f32 to vector<8x128xf32>
    %10 = arith.select %7, %8, %9 : vector<8x128xi1>, vector<8x128xf32>
    %11 = vector.broadcast %1 : f32 to vector<8x128xf32>
    %12 = vector.broadcast %3 : f32 to vector<8x128xf32>
    %13 = arith.select %7, %11, %12 : vector<8x128xi1>, vector<8x128xf32>
    %14 = arith.mulf %4, %10 : vector<8x128xf32>
    %15 = arith.subf %13, %5 : vector<8x128xf32>
    %16 = arith.addf %14, %15 : vector<8x128xf32>
    %17 = arith.mulf %16, %16 : vector<8x128xf32>
    %18 = vector.shape_cast %17 : vector<8x128xf32> to vector<1x8x128xf32>
    %cst = arith.constant dense<0.000000e+00> : vector<8x128xf32>
    %19 = vector.multi_reduction <add>, %18, %cst [0] : vector<1x8x128xf32> to vector<8x128xf32>
    %c0_4 = arith.constant 0 : index
    %c0_5 = arith.constant 0 : index
    %20 = vector.load %arg4[%c0_4, %c0_5] : memref<8x128xf32, #tpu.memory_space<vmem>>, vector<8x128xf32>
    tpu.vector_store %arg4[%c0_4, %c0_5], %19 {strides = array<i32>} : memref<8x128xf32, #tpu.memory_space<vmem>>, vector<8x128xf32>,
    return
  }
  func.func @transform_0(%arg0: i32, %arg1: memref<4xf32, #tpu.memory_space<smem>>) -> (i32, i32) {
    %c0_i32 = arith.constant 0 : i32
    %c0_i32_0 = arith.constant 0 : i32
    return %arg0, %c0_i32 : i32, i32
  }
  func.func @transform_1(%arg0: i32, %arg1: memref<4xf32, #tpu.memory_space<smem>>) -> (i32, i32) {
    %c0_i32 = arith.constant 0 : i32
    %c0_i32_0 = arith.constant 0 : i32
    return %arg0, %c0_i32 : i32, i32
  }
  func.func @transform_2(%arg0: i32, %arg1: memref<4xf32, #tpu.memory_space<smem>>) -> (i32, i32) {
    %c0_i32 = arith.constant 0 : i32
    %c0_i32_0 = arith.constant 0 : i32
    return %arg0, %c0_i32 : i32, i32
  }
}

</mosaic_0001>

<llo_original>
// kernel: tpu_custom_call.1
$region0: #{tpu_custom_call.1}
  #allocation0 [shape = 'u32[]', space=smem, size = 0x4, offset = 0x4, fixed_abs, tag = 'smem constant byte address 0x4 - core index']
  #allocation1 [shape = 'u32[72,128]{1,0:T(1,128)}', space=vmem, size = 0x9000, scoped, tag = 'internal scratch']
  #allocation2 [shape = 's32[1]{0}', space=sflag, size = 0x4, scoped, tag = 'scoped memory for tpu_custom_call.1']
  #allocation3 [shape = 'u8[512]{0}', space=smem, size = 0x200, scoped, tag = 'prefetched SMEM operand 0']
  %s0 = inlined_call_operand.hbm [shape: f32[4], index: 0, kind: input, shape index: {}]
  %s1 = inlined_call_operand.hbm [shape: f32[8,128], index: 1, kind: input, shape index: {}]
  %s2 = inlined_call_operand.hbm [shape: f32[8,128], index: 2, kind: input, shape index: {}]
  %s3 = inlined_call_operand.hbm [shape: f32[8,128], index: 3, kind: output, shape index: {}]
  %s4 = sld [smem:[#allocation0]]
  $region26: #{tpu_custom_call.1} parent=0
    _
  %s6 = ssub.s32 1, %s4
  %s7 = scalar_select 0, %s6, %s4
  %s9 = sshll.u32 %s0, 4
  %s10 = int_to_ptr.hbm [resolvable:$true] %s9
  %12 = dma.hbm_to_smem %s10, 16, [#allocation3], [#allocation2]
  %14 = dma.done [#allocation2], 16
  %15 = sfence
  $region1: #{tpu_custom_call.1} parent=0
    #allocation4 [shape = 'u8[4096]{0}', space=vmem, size = 0x1000, scoped, tag = 'input window, operand 1, single buffered']
    #allocation5 [shape = 's32[1]{0}', space=sflag, size = 0x4, scoped, tag = 'scoped memory for tpu_custom_call.1']
    #allocation6 [shape = 's32[1]{0}', space=sflag, size = 0x4, scoped, tag = 'scoped memory for tpu_custom_call.1']
    #allocation7 [shape = 'u8[4096]{0}', space=vmem, size = 0x1000, scoped, tag = 'input window, operand 2, single buffered']
    #allocation8 [shape = 's32[1]{0}', space=sflag, size = 0x4, scoped, tag = 'scoped memory for tpu_custom_call.1']
    #allocation9 [shape = 'u8[4096]{0}', space=vmem, size = 0x1000, scoped, tag = 'output window, operand 0, single buffered']
    %16 = vsyncpa [#allocation5], 0
    %17 = vsyncpa [#allocation8], 0
    %18 = vsyncpa [#allocation6], 0
    // Predicated region
    $region2: #{tpu_custom_call.1} parent=1 // pred_check
      _
    $region3: #{tpu_custom_call.1} parent=1 // pred_check_branch
      %20 = sbr.rel (0) target = $region5
    $region4: #{tpu_custom_call.1} parent=1 // pred_region
      %22 = vsyncadd [#allocation5], 0
      %s24 = sshll.u32 %s1, 4
      %s25 = int_to_ptr.hbm [resolvable:$true] %s24
      %s26 = sshll.u32 [#allocation4], 4
      %s27 = int_to_ptr.vmem [resolvable:$true] %s26
      %29 = dma.hbm_to_vmem [thread:$0]  %s25, 128, %s27, [#allocation5]
    $region5: #{tpu_custom_call.1} parent=1 // pred_fallthru
      _
    // Predicated region
    $region6: #{tpu_custom_call.1} parent=1 // pred_check
      _
    $region7: #{tpu_custom_call.1} parent=1 // pred_check_branch
      %31 = sbr.rel (0) target = $region9
    $region8: #{tpu_custom_call.1} parent=1 // pred_region
      %33 = vsyncadd [#allocation8], 0
      %s35 = sshll.u32 %s2, 4
      %s36 = int_to_ptr.hbm [resolvable:$true] %s35
      %s37 = sshll.u32 [#allocation7], 4
      %s38 = int_to_ptr.vmem [resolvable:$true] %s37
      %40 = dma.hbm_to_vmem [thread:$0]  %s36, 128, %s38, [#allocation8]
    $region9: #{tpu_custom_call.1} parent=1 // pred_fallthru
      _
    // Predicated region
    $region10: #{tpu_custom_call.1} parent=1 // pred_check
      _
    $region11: #{tpu_custom_call.1} parent=1 // pred_check_branch
      %42 = sbr.rel (0) target = $region13
    $region12: #{tpu_custom_call.1} parent=1 // pred_region
      %44 = dma.done [#allocation5], 128
    $region13: #{tpu_custom_call.1} parent=1 // pred_fallthru
      _
    // Predicated region
    $region14: #{tpu_custom_call.1} parent=1 // pred_check
      _
    $region15: #{tpu_custom_call.1} parent=1 // pred_check_branch
      %46 = sbr.rel (0) target = $region17
    $region16: #{tpu_custom_call.1} parent=1 // pred_region
      %48 = dma.done [#allocation8], 128
    $region17: #{tpu_custom_call.1} parent=1 // pred_fallthru
      _
    %s49 = sld [smem:[#allocation3]]
    %s50 = sld [smem:[#allocation3 + $0x1]]
    %s51 = sld [smem:[#allocation3 + $0x2]]
    %s52 = sld [smem:[#allocation3 + $0x3]]
    %v53 = vld [vmem:[#allocation4] sm:$0xff]
    %v54 = vld [vmem:[#allocation7] sm:$0xff]
    %v55 = vstv %s49
    %vm56 = vcmp.lt.f32.partialorder %v53, %v55
    %v57 = vstv %s50
    %v58 = vstv %s51
    %v59 = vsel %vm56, %v57, %v58
    %v60 = vstv %s52
    %v61 = vsel %vm56, %v57, %v60
    %v62 = vmul.f32 %v53, %v59
    %v63 = vsub.f32 %v61, %v54
    %v64 = vadd.f32 %v62, %v63
    %v65 = vmul.f32 %v64, %v64
    %v66 = vadd.f32 %v65, 0.0
    %67 = vst [vmem:[#allocation9] sm:$0xff] %v66
    // Predicated region
    $region18: #{tpu_custom_call.1} parent=1 // pred_check
      _
    $region19: #{tpu_custom_call.1} parent=1 // pred_check_branch
      %69 = sbr.rel (0) target = $region21
    $region20: #{tpu_custom_call.1} parent=1 // pred_region
      %71 = vsyncadd [#allocation6], 0
      %s73 = sshll.u32 [#allocation9], 4
      %s74 = int_to_ptr.vmem [resolvable:$true] %s73
      %s75 = sshll.u32 %s3, 4
      %s76 = int_to_ptr.hbm [resolvable:$true] %s75
      %78 = dma.vmem_to_hbm [thread:$0]  %s74, 128, %s76, [#allocation6]
    $region21: #{tpu_custom_call.1} parent=1 // pred_fallthru
      _
    // Predicated region
    $region22: #{tpu_custom_call.1} parent=1 // pred_check
      _
    $region23: #{tpu_custom_call.1} parent=1 // pred_check_branch
      %80 = sbr.rel (0) target = $region25
    $region24: #{tpu_custom_call.1} parent=1 // pred_region
      %82 = dma.done [#allocation6], 128
    $region25: #{tpu_custom_call.1} parent=1 // pred_fallthru
      _
    %83 = vsyncpa [#allocation5], 1
    %84 = vsyncpa [#allocation8], 1
    %85 = vsyncpa [#allocation6], 1

</llo_original>
